<compile_context>
chip_gen: v7x
topology: tpu7x:2x2x1
jax: 0.10.0
libtpu: 0.0.40
codegen_flags: <defaults>
</compile_context>

<pallas_src>
import jax
import jax.numpy as jnp
import numpy as np
from jax.experimental import pallas as pl
from jax.experimental.pallas import tpu as pltpu


def _pick_tile(total, target, align):
    """Largest divisor of `total` that is <= target and either equals `total`
    or is a multiple of `align` (TPU block divisibility rule)."""
    if total <= target:
        return total
    t = (target // align) * align
    while t >= align:
        if total % t == 0:
            return t
        t -= align
    return total  # no aligned divisor found -> leave the axis untiled


def _full_integral_kernel(x_ref, y_ref, w_ref,
                          w1_ref, b1_ref, g_ref, be_ref, w2_ref, b2_ref,
                          out_ref, acc_ref):
    """One (batch_tile, num_x_tile) step of the fused MLP + weighted mean.

    x_ref:  (BT, TN, 1)      raw x values (MLP input feature 0)
    y_ref:  (BT, TN, D)      raw y values (MLP input features 1..D, and weight)
    w_ref:  (BT, TN, 1)      per-sample weight = mask/count (or 1/num_x)
    w1_ref: (D+1, H)  b1/g/be: (1, H)   w2: (H, Z*D)   b2: (1, Z*D)
    out_ref:(BT, Z*D)        final result rows for this batch tile
    acc_ref:(BT, Z*D) f32    accumulator across num_x tiles
    """
    ni = pl.program_id(1)

    @pl.when(ni == 0)
    def _():
        acc_ref[...] = jnp.zeros_like(acc_ref)

    bt, tn, din = y_ref.shape
    zd = w2_ref.shape[1]
    m = bt * tn

    xf = x_ref[...].reshape(m, 1)          # (M, 1)
    yf = y_ref[...].reshape(m, din)        # (M, D)

    # ---- Linear(in_dim+1 -> hidden): K is tiny, do it as VPU broadcast FMAs.
    h = xf * w1_ref[0:1, :] + b1_ref[...]                 # (M, H)
    for d in range(din):                                  # static, D is small
        h = h + yf[:, d:d + 1] * w1_ref[d + 1:d + 2, :]

    # ---- LayerNorm over hidden (torch default: eps=1e-5, biased variance)
    mu = jnp.mean(h, axis=-1, keepdims=True)
    var = jnp.mean((h - mu) ** 2, axis=-1, keepdims=True)
    hn = (h - mu) * jax.lax.rsqrt(var + 1e-5)
    hn = hn * g_ref[...] + be_ref[...]
    hr = jnp.maximum(hn, 0.0)

    # ---- Linear(hidden -> z_num*in_dim) on the MXU
    k = jnp.dot(hr, w2_ref[...], preferred_element_type=jnp.float32) + b2_ref[...]
    k3 = k.reshape(bt, tn, zd)                            # (BT, TN, Z*D)

    # ---- weighted (masked-mean) partial reduction over this num_x tile.
    #      feature f = z*D + d pairs with y[..., d]; broadcast done in VMEM.
    yw = y_ref[...] * w_ref[...]                          # (BT, TN, D)
    if din == 1:
        weighted = k3 * yw                                # lane broadcast
    else:
        weighted = k3 * jnp.tile(yw, (1, 1, zd // din))
    acc_ref[...] += jnp.sum(weighted, axis=1)             # (BT, Z*D)

    @pl.when(ni == pl.num_programs(1) - 1)
    def _():
        out_ref[...] = acc_ref[...]


def full_integral_forward(params, x, y, drop_mask=None):
    """JAX wrapper reproducing FullIntegralKernel.forward.

    x: (batch, num_x) float32
    y: (batch, num_x, in_dim) float32
    drop_mask: optional (batch, num_x) bool
    returns: (batch, in_dim, z_num) float32
    """
    batch, num_x = x.shape
    in_dim = y.shape[-1]
    hidden = params["w1"].shape[1]
    zd = params["w2"].shape[1]
    z_num = zd // in_dim

    # Per-sample weight folding mask and 1/count (masked mean -> weighted sum).
    if drop_mask is None:
        w = jnp.full((batch, num_x, 1), 1.0 / num_x, jnp.float32)
    else:
        m = drop_mask.astype(jnp.float32)
        cnt = jnp.maximum(m.sum(-1, keepdims=True), 1.0)
        w = (m / cnt)[..., None]                           # (B, N, 1)

    x3 = x[..., None].astype(jnp.float32)                  # (B, N, 1)
    y = y.astype(jnp.float32)

    w1 = params["w1"]
    b1 = params["b1"][None, :]
    g = params["gamma"][None, :]
    be = params["beta"][None, :]
    w2 = params["w2"]
    b2 = params["b2"][None, :]

    # Tile sizes: batch blocks of up to 8 rows, num_x tiled in multiples of 128
    # sized to keep per-step VMEM well under the default scoped limits.
    b_tile = _pick_tile(batch, 8, 8)
    bytes_per_row = 4 * (3 * hidden + 2 * zd + 2 * (in_dim + 2))
    n_target = max(128, (6 * 1024 * 1024) // max(b_tile * bytes_per_row, 1))
    tile_n = _pick_tile(num_x, n_target, 128)
    grid = (batch // b_tile, num_x // tile_n)

    out = pl.pallas_call(
        _full_integral_kernel,
        out_shape=jax.ShapeDtypeStruct((batch, zd), jnp.float32),
        grid_spec=pltpu.PrefetchScalarGridSpec(
            num_scalar_prefetch=0,
            grid=grid,
            in_specs=[
                pl.BlockSpec((b_tile, tile_n, 1), lambda bi, ni: (bi, ni, 0)),
                pl.BlockSpec((b_tile, tile_n, in_dim), lambda bi, ni: (bi, ni, 0)),
                pl.BlockSpec((b_tile, tile_n, 1), lambda bi, ni: (bi, ni, 0)),
                pl.BlockSpec((in_dim + 1, hidden), lambda bi, ni: (0, 0)),
                pl.BlockSpec((1, hidden), lambda bi, ni: (0, 0)),
                pl.BlockSpec((1, hidden), lambda bi, ni: (0, 0)),
                pl.BlockSpec((1, hidden), lambda bi, ni: (0, 0)),
                pl.BlockSpec((hidden, zd), lambda bi, ni: (0, 0)),
                pl.BlockSpec((1, zd), lambda bi, ni: (0, 0)),
            ],
            out_specs=pl.BlockSpec((b_tile, zd), lambda bi, ni: (bi, 0)),
            scratch_shapes=[pltpu.VMEM((b_tile, zd), jnp.float32)],
        ),
        compiler_params=pltpu.CompilerParams(
            dimension_semantics=("parallel", "arbitrary"),
            vmem_limit_bytes=40 * 1024 * 1024,
        ),
    )(x3, y, w, w1, b1, g, be, w2, b2)

    out = out.reshape(batch, z_num, in_dim)                 # (B, Z, D)
    return jnp.swapaxes(out, 1, 2)                          # (B, D, Z)


def init_params(key, z_num, kernel_coef=1, in_dim=1):
    """Deterministic synthetic init matching the nn.Module parameter shapes."""
    hidden = z_num * kernel_coef
    k1, k2, k3, k4 = jax.random.split(key, 4)

    def lin_init(kw, kb, fan_in, fan_out):
        bound = 1.0 / np.sqrt(fan_in)
        w = jax.random.uniform(kw, (fan_in, fan_out), jnp.float32, -bound, bound)
        b = jax.random.uniform(kb, (fan_out,), jnp.float32, -bound, bound)
        return w, b

    w1, b1 = lin_init(k1, k2, in_dim + 1, hidden)
    w2, b2 = lin_init(k3, k4, hidden, z_num * in_dim)
    return dict(
        w1=w1, b1=b1,
        gamma=jnp.ones((hidden,), jnp.float32),
        beta=jnp.zeros((hidden,), jnp.float32),
        w2=w2, b2=b2,
    )


def reference(params, x, y, drop_mask=None):
    """Pure-JAX reference mirroring the PyTorch forward exactly."""
    in_dim = y.shape[-1]
    z_num = params["w2"].shape[1] // in_dim
    batch, num_x = x.shape

    ki = jnp.concatenate([x[..., None], y], axis=-1)
    h = ki @ params["w1"] + params["b1"]
    mu = h.mean(-1, keepdims=True)
    var = ((h - mu) ** 2).mean(-1, keepdims=True)
    h = (h - mu) / jnp.sqrt(var + 1e-5) * params["gamma"] + params["beta"]
    h = jnp.maximum(h, 0.0)
    k = h @ params["w2"] + params["b2"]                          # (B, N, Z*D)
    k = k.reshape(batch, num_x, z_num, in_dim).transpose(0, 2, 1, 3)  # (B, Z, N, D)
    yb = y[:, None]                                              # (B, 1, N, D)
    if drop_mask is None:
        out = (k * yb).mean(-2)
    else:
        m = drop_mask[:, None, :, None].astype(jnp.float32)
        s = (k * yb * m).sum(-2)
        cnt = jnp.maximum(drop_mask.sum(-1), 1).astype(jnp.float32)[:, None, None]
        out = s / cnt
    return jnp.swapaxes(out, 1, 2)                               # (B, D, Z)


if __name__ == "__main__":
    key = jax.random.PRNGKey(0)
    kp, kx, ky, km = jax.random.split(key, 4)

    z_num, kernel_coef, in_dim = 32, 2, 1
    batch, num_x = 2, 8

    params = init_params(kp, z_num, kernel_coef, in_dim)
    x = jax.random.normal(kx, (batch, num_x), jnp.float32)
    y = jax.random.normal(ky, (batch, num_x, in_dim), jnp.float32)
    drop_mask = jax.random.bernoulli(km, 0.7, (batch, num_x))

    # no-mask path (mean over num_x)
    out_nomask = jax.block_until_ready(full_integral_forward(params, x, y))
    # masked path
    out_masked = jax.block_until_ready(full_integral_forward(params, x, y, drop_mask))

    ref_nomask = reference(params, x, y)
    ref_masked = reference(params, x, y, drop_mask)

    assert out_nomask.shape == (batch, in_dim, z_num), out_nomask.shape
    assert out_masked.shape == (batch, in_dim, z_num), out_masked.shape
    assert np.allclose(np.asarray(out_nomask), np.asarray(ref_nomask), atol=1e-3, rtol=1e-3)
    assert np.allclose(np.asarray(out_masked), np.asarray(ref_masked), atol=1e-3, rtol=1e-3)

    print("KERNEL_OK")
</pallas_src>

<mosaic_0001>
module attributes {stable_mosaic.version = 11 : i64} {
  func.func @_full_integral_kernel(%arg0: i32, %arg1: i32, %arg2: memref<2x8x1xf32, #tpu.memory_space<vmem>>, %arg3: memref<2x8x1xf32, #tpu.memory_space<vmem>>, %arg4: memref<2x8x1xf32, #tpu.memory_space<vmem>>, %arg5: memref<2x64xf32, #tpu.memory_space<vmem>>, %arg6: memref<1x64xf32, #tpu.memory_space<vmem>>, %arg7: memref<1x64xf32, #tpu.memory_space<vmem>>, %arg8: memref<1x64xf32, #tpu.memory_space<vmem>>, %arg9: memref<64x32xf32, #tpu.memory_space<vmem>>, %arg10: memref<1x32xf32, #tpu.memory_space<vmem>>, %arg11: memref<2x32xf32, #tpu.memory_space<vmem>>, %arg12: memref<2x32xf32, #tpu.memory_space<vmem>>) attributes {dimension_semantics = [#tpu.dimension_semantics<parallel>, #tpu.dimension_semantics<arbitrary>], iteration_bounds = array<i64: 1, 1>, scalar_prefetch = 0 : i64, scratch_operands = 1 : i64, tpu.core_type = #tpu.core_type<tc>, window_params = [{transform_indices = @transform_0, window_bounds = array<i64: 2, 8, 1>}, {transform_indices = @transform_1, window_bounds = array<i64: 2, 8, 1>}, {transform_indices = @transform_2, window_bounds = array<i64: 2, 8, 1>}, {pipeline_mode = #tpu.pipeline_mode<synchronous>, transform_indices = @transform_3, window_bounds = array<i64: 2, 64>}, {pipeline_mode = #tpu.pipeline_mode<synchronous>, transform_indices = @transform_4, window_bounds = array<i64: 1, 64>}, {pipeline_mode = #tpu.pipeline_mode<synchronous>, transform_indices = @transform_5, window_bounds = array<i64: 1, 64>}, {pipeline_mode = #tpu.pipeline_mode<synchronous>, transform_indices = @transform_6, window_bounds = array<i64: 1, 64>}, {pipeline_mode = #tpu.pipeline_mode<synchronous>, transform_indices = @transform_7, window_bounds = array<i64: 64, 32>}, {pipeline_mode = #tpu.pipeline_mode<synchronous>, transform_indices = @transform_8, window_bounds = array<i64: 1, 32>}, {transform_indices = @transform_9, window_bounds = array<i64: 2, 32>}]} {
    %c0_i32 = arith.constant 0 : i32
    %0 = arith.cmpi eq, %arg1, %c0_i32 : i32
    %1 = arith.extui %0 : i1 to i32
    %c0_i32_0 = arith.constant 0 : i32
    %2 = arith.cmpi ne, %1, %c0_i32_0 : i32
    scf.if %2 {
      %cst_38 = arith.constant 0.000000e+00 : f32
      %63 = vector.broadcast %cst_38 : f32 to vector<2x32xf32>
      %c0_39 = arith.constant 0 : index
      %c0_40 = arith.constant 0 : index
      %64 = vector.load %arg12[%c0_39, %c0_40] : memref<2x32xf32, #tpu.memory_space<vmem>>, vector<2x32xf32>
      tpu.vector_store %arg12[%c0_39, %c0_40], %63 {strides = array<i32>} : memref<2x32xf32, #tpu.memory_space<vmem>>, vector<2x32xf32>,
    } else {
    }
    %c0 = arith.constant 0 : index
    %c0_1 = arith.constant 0 : index
    %c0_2 = arith.constant 0 : index
    %3 = vector.load %arg2[%c0, %c0_1, %c0_2] : memref<2x8x1xf32, #tpu.memory_space<vmem>>, vector<2x8x1xf32>
    %4 = vector.shape_cast %3 : vector<2x8x1xf32> to vector<16x1xf32>
    %c0_3 = arith.constant 0 : index
    %c0_4 = arith.constant 0 : index
    %c0_5 = arith.constant 0 : index
    %5 = vector.load %arg3[%c0_3, %c0_4, %c0_5] : memref<2x8x1xf32, #tpu.memory_space<vmem>>, vector<2x8x1xf32>
    %6 = vector.shape_cast %5 : vector<2x8x1xf32> to vector<16x1xf32>
    %c0_6 = arith.constant 0 : index
    %c0_7 = arith.constant 0 : index
    %7 = vector.load %arg5[%c0_6, %c0_7] : memref<2x64xf32, #tpu.memory_space<vmem>>, vector<1x64xf32>
    %8 = vector.broadcast %4 : vector<16x1xf32> to vector<16x64xf32>
    %9 = vector.broadcast %7 : vector<1x64xf32> to vector<16x64xf32>
    %10 = arith.mulf %8, %9 : vector<16x64xf32>
    %c0_8 = arith.constant 0 : index
    %c0_9 = arith.constant 0 : index
    %11 = vector.load %arg6[%c0_8, %c0_9] : memref<1x64xf32, #tpu.memory_space<vmem>>, vector<1x64xf32>
    %12 = vector.broadcast %11 : vector<1x64xf32> to vector<16x64xf32>
    %13 = arith.addf %10, %12 : vector<16x64xf32>
    %c1 = arith.constant 1 : index
    %c0_10 = arith.constant 0 : index
    %14 = vector.load %arg5[%c1, %c0_10] : memref<2x64xf32, #tpu.memory_space<vmem>>, vector<1x64xf32>
    %15 = vector.broadcast %6 : vector<16x1xf32> to vector<16x64xf32>
    %16 = vector.broadcast %14 : vector<1x64xf32> to vector<16x64xf32>
    %17 = arith.mulf %15, %16 : vector<16x64xf32>
    %18 = arith.addf %13, %17 : vector<16x64xf32>
    %cst = arith.constant dense<0.000000e+00> : vector<16xf32>
    %19 = vector.multi_reduction <add>, %18, %cst [1] : vector<16x64xf32> to vector<16xf32>
    %20 = vector.shape_cast %19 : vector<16xf32> to vector<16x1xf32>
    %cst_11 = arith.constant 6.400000e+01 : f32
    %21 = vector.broadcast %cst_11 : f32 to vector<16x1xf32>
    %22 = arith.divf %20, %21 : vector<16x1xf32>
    %23 = vector.broadcast %22 : vector<16x1xf32> to vector<16x64xf32>
    %24 = arith.subf %18, %23 : vector<16x64xf32>
    %25 = arith.mulf %24, %24 : vector<16x64xf32>
    %cst_12 = arith.constant dense<0.000000e+00> : vector<16xf32>
    %26 = vector.multi_reduction <add>, %25, %cst_12 [1] : vector<16x64xf32> to vector<16xf32>
    %27 = vector.shape_cast %26 : vector<16xf32> to vector<16x1xf32>
    %cst_13 = arith.constant 6.400000e+01 : f32
    %28 = vector.broadcast %cst_13 : f32 to vector<16x1xf32>
    %29 = arith.divf %27, %28 : vector<16x1xf32>
    %30 = vector.broadcast %22 : vector<16x1xf32> to vector<16x64xf32>
    %31 = arith.subf %18, %30 : vector<16x64xf32>
    %cst_14 = arith.constant 9.99999974E-6 : f32
    %32 = vector.broadcast %cst_14 : f32 to vector<16x1xf32>
    %33 = arith.addf %29, %32 : vector<16x1xf32>
    %34 = math.rsqrt %33 : vector<16x1xf32>
    %35 = vector.broadcast %34 : vector<16x1xf32> to vector<16x64xf32>
    %36 = arith.mulf %31, %35 : vector<16x64xf32>
    %c0_15 = arith.constant 0 : index
    %c0_16 = arith.constant 0 : index
    %37 = vector.load %arg7[%c0_15, %c0_16] : memref<1x64xf32, #tpu.memory_space<vmem>>, vector<1x64xf32>
    %38 = vector.broadcast %37 : vector<1x64xf32> to vector<16x64xf32>
    %39 = arith.mulf %36, %38 : vector<16x64xf32>
    %c0_17 = arith.constant 0 : index
    %c0_18 = arith.constant 0 : index
    %40 = vector.load %arg8[%c0_17, %c0_18] : memref<1x64xf32, #tpu.memory_space<vmem>>, vector<1x64xf32>
    %41 = vector.broadcast %40 : vector<1x64xf32> to vector<16x64xf32>
    %42 = arith.addf %39, %41 : vector<16x64xf32>
    %cst_19 = arith.constant 0.000000e+00 : f32
    %43 = vector.broadcast %cst_19 : f32 to vector<16x64xf32>
    %44 = arith.maximumf %42, %43 : vector<16x64xf32>
    %c0_20 = arith.constant 0 : index
    %c0_21 = arith.constant 0 : index
    %45 = vector.load %arg9[%c0_20, %c0_21] : memref<64x32xf32, #tpu.memory_space<vmem>>, vector<64x32xf32>
    %cst_22 = arith.constant dense<0.000000e+00> : vector<16x32xf32>
    %46 = tpu.matmul %44, %45, %cst_22 {dimension_numbers = #tpu.dot_dimension_numbers<[1], [0], [0], [1], [0, 0, 1, 1], [], []>} : vector<16x64xf32>, vector<64x32xf32>, vector<16x32xf32> -> vector<16x32xf32>
    %c0_23 = arith.constant 0 : index
    %c0_24 = arith.constant 0 : index
    %47 = vector.load %arg10[%c0_23, %c0_24] : memref<1x32xf32, #tpu.memory_space<vmem>>, vector<1x32xf32>
    %48 = vector.broadcast %47 : vector<1x32xf32> to vector<16x32xf32>
    %49 = arith.addf %46, %48 : vector<16x32xf32>
    %50 = vector.shape_cast %49 : vector<16x32xf32> to vector<2x8x32xf32>
    %c0_25 = arith.constant 0 : index
    %c0_26 = arith.constant 0 : index
    %c0_27 = arith.constant 0 : index
    %51 = vector.load %arg3[%c0_25, %c0_26, %c0_27] : memref<2x8x1xf32, #tpu.memory_space<vmem>>, vector<2x8x1xf32>
    %c0_28 = arith.constant 0 : index
    %c0_29 = arith.constant 0 : index
    %c0_30 = arith.constant 0 : index
    %52 = vector.load %arg4[%c0_28, %c0_29, %c0_30] : memref<2x8x1xf32, #tpu.memory_space<vmem>>, vector<2x8x1xf32>
    %53 = arith.mulf %51, %52 : vector<2x8x1xf32>
    %54 = vector.broadcast %53 : vector<2x8x1xf32> to vector<2x8x32xf32>
    %55 = arith.mulf %50, %54 : vector<2x8x32xf32>
    %c0_31 = arith.constant 0 : index
    %c0_32 = arith.constant 0 : index
    %56 = vector.load %arg12[%c0_31, %c0_32] : memref<2x32xf32, #tpu.memory_space<vmem>>, vector<2x32xf32>
    %cst_33 = arith.constant dense<0.000000e+00> : vector<2x32xf32>
    %57 = vector.multi_reduction <add>, %55, %cst_33 [1] : vector<2x8x32xf32> to vector<2x32xf32>
    %58 = arith.addf %56, %57 : vector<2x32xf32>
    %c0_34 = arith.constant 0 : index
    %c0_35 = arith.constant 0 : index
    %59 = vector.load %arg12[%c0_34, %c0_35] : memref<2x32xf32, #tpu.memory_space<vmem>>, vector<2x32xf32>
    tpu.vector_store %arg12[%c0_34, %c0_35], %58 {strides = array<i32>} : memref<2x32xf32, #tpu.memory_space<vmem>>, vector<2x32xf32>,
    %c0_i32_36 = arith.constant 0 : i32
    %60 = arith.cmpi eq, %arg1, %c0_i32_36 : i32
    %61 = arith.extui %60 : i1 to i32
    %c0_i32_37 = arith.constant 0 : i32
    %62 = arith.cmpi ne, %61, %c0_i32_37 : i32
    scf.if %62 {
      %c0_38 = arith.constant 0 : index
      %c0_39 = arith.constant 0 : index
      %63 = vector.load %arg12[%c0_38, %c0_39] : memref<2x32xf32, #tpu.memory_space<vmem>>, vector<2x32xf32>
      %c0_40 = arith.constant 0 : index
      %c0_41 = arith.constant 0 : index
      %64 = vector.load %arg11[%c0_40, %c0_41] : memref<2x32xf32, #tpu.memory_space<vmem>>, vector<2x32xf32>
      tpu.vector_store %arg11[%c0_40, %c0_41], %63 {strides = array<i32>} : memref<2x32xf32, #tpu.memory_space<vmem>>, vector<2x32xf32>,
    } else {
    }
    return
  }
  func.func @transform_0(%arg0: i32, %arg1: i32) -> (i32, i32, i32) {
    %c0_i32 = arith.constant 0 : i32
    %c0_i32_0 = arith.constant 0 : i32
    return %arg0, %arg1, %c0_i32 : i32, i32, i32
  }
  func.func @transform_1(%arg0: i32, %arg1: i32) -> (i32, i32, i32) {
    %c0_i32 = arith.constant 0 : i32
    %c0_i32_0 = arith.constant 0 : i32
    return %arg0, %arg1, %c0_i32 : i32, i32, i32
  }
  func.func @transform_2(%arg0: i32, %arg1: i32) -> (i32, i32, i32) {
    %c0_i32 = arith.constant 0 : i32
    %c0_i32_0 = arith.constant 0 : i32
    return %arg0, %arg1, %c0_i32 : i32, i32, i32
  }
  func.func @transform_3(%arg0: i32, %arg1: i32) -> (i32, i32) {
    %c0_i32 = arith.constant 0 : i32
    %c0_i32_0 = arith.constant 0 : i32
    %c0_i32_1 = arith.constant 0 : i32
    return %c0_i32, %c0_i32_0 : i32, i32
  }
  func.func @transform_4(%arg0: i32, %arg1: i32) -> (i32, i32) {
    %c0_i32 = arith.constant 0 : i32
    %c0_i32_0 = arith.constant 0 : i32
    %c0_i32_1 = arith.constant 0 : i32
    return %c0_i32, %c0_i32_0 : i32, i32
  }
  func.func @transform_5(%arg0: i32, %arg1: i32) -> (i32, i32) {
    %c0_i32 = arith.constant 0 : i32
    %c0_i32_0 = arith.constant 0 : i32
    %c0_i32_1 = arith.constant 0 : i32
    return %c0_i32, %c0_i32_0 : i32, i32
  }
  func.func @transform_6(%arg0: i32, %arg1: i32) -> (i32, i32) {
    %c0_i32 = arith.constant 0 : i32
    %c0_i32_0 = arith.constant 0 : i32
    %c0_i32_1 = arith.constant 0 : i32
    return %c0_i32, %c0_i32_0 : i32, i32
  }
  func.func @transform_7(%arg0: i32, %arg1: i32) -> (i32, i32) {
    %c0_i32 = arith.constant 0 : i32
    %c0_i32_0 = arith.constant 0 : i32
    %c0_i32_1 = arith.constant 0 : i32
    return %c0_i32, %c0_i32_0 : i32, i32
  }
  func.func @transform_8(%arg0: i32, %arg1: i32) -> (i32, i32) {
    %c0_i32 = arith.constant 0 : i32
    %c0_i32_0 = arith.constant 0 : i32
    %c0_i32_1 = arith.constant 0 : i32
    return %c0_i32, %c0_i32_0 : i32, i32
  }
  func.func @transform_9(%arg0: i32, %arg1: i32) -> (i32, i32) {
    %c0_i32 = arith.constant 0 : i32
    %c0_i32_0 = arith.constant 0 : i32
    return %arg0, %c0_i32 : i32, i32
  }
}

</mosaic_0001>

<llo_original>
// kernel: tpu_custom_call.1
$region0: #{tpu_custom_call.1}
  #allocation0 [shape = 'u32[]', space=smem, size = 0x4, offset = 0x4, fixed_abs, tag = 'smem constant byte address 0x4 - core index']
  #allocation1 [shape = 'u32[144,128]{1,0:T(1,128)}', space=vmem, size = 0x12000, scoped, tag = 'internal scratch']
  #allocation2 [shape = 'f32[2,32]{1,0:T(2,128)}', space=vmem, size = 0x400, scoped, tag = 'scratch operand']
  %s0 = inlined_call_operand.vmem [shape: f32[2,8,1], index: 0, kind: input, shape index: {}]
  %s1 = inlined_call_operand.vmem [shape: f32[2,8,1], index: 1, kind: input, shape index: {}]
  %s2 = inlined_call_operand.vmem [shape: f32[2,8,1], index: 2, kind: input, shape index: {}]
  %s3 = inlined_call_operand.vmem [shape: f32[2,64], index: 3, kind: input, shape index: {}]
  %s4 = inlined_call_operand.vmem [shape: f32[1,64], index: 4, kind: input, shape index: {}]
  %s5 = inlined_call_operand.vmem [shape: f32[1,64], index: 5, kind: input, shape index: {}]
  %s6 = inlined_call_operand.vmem [shape: f32[1,64], index: 6, kind: input, shape index: {}]
  %s7 = inlined_call_operand.vmem [shape: f32[64,32], index: 7, kind: input, shape index: {}]
  %s8 = inlined_call_operand.vmem [shape: f32[1,32], index: 8, kind: input, shape index: {}]
  %s9 = inlined_call_operand.hbm [shape: f32[2,32], index: 9, kind: output, shape index: {}]
  %s10 = sld [smem:[#allocation0]]
  $region54: #{tpu_custom_call.1} parent=0
    _
  %s12 = ssub.s32 1, %s10
  %s13 = scalar_select 0, %s12, %s10
  $region1: #{tpu_custom_call.1} parent=0
    #allocation3 [shape = 'u8[1024]{0}', space=vmem, size = 0x400, scoped, tag = 'output window, operand 0, single buffered']
    #allocation4 [shape = 's32[1]{0}', space=sflag, size = 0x4, scoped, tag = 'scoped memory for tpu_custom_call.1']
    %14 = vsyncpa [#allocation4], 0
    // Predicated region
    $region2: #{tpu_custom_call.1} parent=1 // pred_check
      _
    $region3: #{tpu_custom_call.1} parent=1 // pred_check_branch
      %16 = sbr.rel (0) target = $region5
    $region4: #{tpu_custom_call.1} parent=1 // pred_region
      _
    $region5: #{tpu_custom_call.1} parent=1 // pred_fallthru
      _
    // Predicated region
    $region6: #{tpu_custom_call.1} parent=1 // pred_check
      _
    $region7: #{tpu_custom_call.1} parent=1 // pred_check_branch
      %18 = sbr.rel (0) target = $region9
    $region8: #{tpu_custom_call.1} parent=1 // pred_region
      _
    $region9: #{tpu_custom_call.1} parent=1 // pred_fallthru
      _
    // Predicated region
    $region10: #{tpu_custom_call.1} parent=1 // pred_check
      _
    $region11: #{tpu_custom_call.1} parent=1 // pred_check_branch
      %20 = sbr.rel (0) target = $region13
    $region12: #{tpu_custom_call.1} parent=1 // pred_region
      _
    $region13: #{tpu_custom_call.1} parent=1 // pred_fallthru
      _
    // Predicated region
    $region14: #{tpu_custom_call.1} parent=1 // pred_check
      _
    $region15: #{tpu_custom_call.1} parent=1 // pred_check_branch
      %22 = sbr.rel (0) target = $region17
    $region16: #{tpu_custom_call.1} parent=1 // pred_region
      _
    $region17: #{tpu_custom_call.1} parent=1 // pred_fallthru
      _
    // Predicated region
    $region18: #{tpu_custom_call.1} parent=1 // pred_check
      _
    $region19: #{tpu_custom_call.1} parent=1 // pred_check_branch
      %24 = sbr.rel (0) target = $region21
    $region20: #{tpu_custom_call.1} parent=1 // pred_region
      _
    $region21: #{tpu_custom_call.1} parent=1 // pred_fallthru
      _
    // Predicated region
    $region22: #{tpu_custom_call.1} parent=1 // pred_check
      _
    $region23: #{tpu_custom_call.1} parent=1 // pred_check_branch
      %26 = sbr.rel (0) target = $region25
    $region24: #{tpu_custom_call.1} parent=1 // pred_region
      _
    $region25: #{tpu_custom_call.1} parent=1 // pred_fallthru
      _
    // Predicated region
    $region26: #{tpu_custom_call.1} parent=1 // pred_check
      _
    $region27: #{tpu_custom_call.1} parent=1 // pred_check_branch
      %28 = sbr.rel (0) target = $region29
    $region28: #{tpu_custom_call.1} parent=1 // pred_region
      _
    $region29: #{tpu_custom_call.1} parent=1 // pred_fallthru
      _
    // Predicated region
    $region30: #{tpu_custom_call.1} parent=1 // pred_check
      _
    $region31: #{tpu_custom_call.1} parent=1 // pred_check_branch
      %30 = sbr.rel (0) target = $region33
    $region32: #{tpu_custom_call.1} parent=1 // pred_region
      _
    $region33: #{tpu_custom_call.1} parent=1 // pred_fallthru
      _
    // Predicated region
    $region34: #{tpu_custom_call.1} parent=1 // pred_check
      _
    $region35: #{tpu_custom_call.1} parent=1 // pred_check_branch
      %32 = sbr.rel (0) target = $region37
    $region36: #{tpu_custom_call.1} parent=1 // pred_region
      _
    $region37: #{tpu_custom_call.1} parent=1 // pred_fallthru
      _
    %p33 = scmp.eq.s32.totalorder 0, 0
    // Predicated region
    $region38: #{tpu_custom_call.1} parent=1 // pred_check
      %p34 = pneg %p33
    $region39: #{tpu_custom_call.1} parent=1 // pred_check_branch
      %36 = sbr.rel (%p34) target = $region41
    $region40: #{tpu_custom_call.1} parent=1 // pred_region
      %vm37 = vcmask 254976
      %38 = vst.msk [vmem:[#allocation2] sm:$0x3] %vm37, 0.0
    $region41: #{tpu_custom_call.1} parent=1 // pred_fallthru
      _
    %v39 = vld [vmem:[%s0] sm:$0xff]
    %v40 = vld [vmem:[%s0 + $0x8] sm:$0xff]
    %v41 = vld [vmem:[%s1] sm:$0xff]
    %v42 = vld [vmem:[%s1 + $0x8] sm:$0xff]
    %v43 = vld [vmem:[%s3] sm:$0x1]
    %45 = vset.pattern.permute.xlu0 0
    %46 = vperm.xlu0 %45, %v39
    %v47 = vpop.permute.xlu0 %46
    %50 = vset.pattern.permute.xlu0 0
    %51 = vperm.xlu0 %50, %v40
    %v52 = vpop.permute.xlu0 %51
    %v54 = vlaneseq
    %v55 = vshrl.u32 %v54, 7
    %v56 = vsub.s32 0, %v55
    %v57 = vrot.slane %v43, %v56
    %v58 = vmul.f32 %v47, %v57
    %v59 = vmul.f32 %v52, %v57
    %v60 = vld [vmem:[%s4] sm:$0x1]
    %v62 = vlaneseq
    %v63 = vshrl.u32 %v62, 7
    %v64 = vsub.s32 0, %v63
    %v65 = vrot.slane %v60, %v64
    %v67 = vadd.f32 %v58, %v65
    %v68 = vadd.f32 %v59, %v65
    %v69 = vld [vmem:[%s3 + $0x1] sm:$0x1]
    %71 = vset.pattern.permute.xlu0 0
    %72 = vperm.xlu0 %71, %v41
    %v73 = vpop.permute.xlu0 %72
    %76 = vset.pattern.permute.xlu0 0
    %77 = vperm.xlu0 %76, %v42
    %v78 = vpop.permute.xlu0 %77
    %v80 = vlaneseq
    %v81 = vshrl.u32 %v80, 7
    %v82 = vsub.s32 0, %v81
    %v83 = vrot.slane %v69, %v82
    %v84 = vmul.f32 %v73, %v83
    %v85 = vmul.f32 %v78, %v83
    %v86 = vadd.f32 %v67, %v84
    %v87 = vadd.f32 %v68, %v85
    %vm88 = vcmask 523264
    %v89 = vsel %vm88, %v86, 0.0
    %90 = vadd.xlane.f32.xlu0 %v89
    %v91 = vpop.xlane.xlu0 %90
    %v92 = vsel %vm88, %v87, 0.0
    %93 = vadd.xlane.f32.xlu0 %v92
    %v94 = vpop.xlane.xlu0 %93
    %v95 = vrcp.pop 64.0
    %v96 = vmul.f32 %v91, %v95
    %v97 = vmul.f32 %v94, %v95
    %v98 = vsub.f32 %v86, %v96
    %v99 = vsub.f32 %v87, %v97
    %v100 = vmul.f32 %v98, %v98
    %v101 = vmul.f32 %v99, %v99
    %v102 = vsel %vm88, %v100, 0.0
    %103 = vadd.xlane.f32.xlu0 %v102
    %v104 = vpop.xlane.xlu0 %103
    %v105 = vsel %vm88, %v101, 0.0
    %106 = vadd.xlane.f32.xlu0 %v105
    %v107 = vpop.xlane.xlu0 %106
    %v108 = vmul.f32 %v104, %v95
    %v109 = vmul.f32 %v107, %v95
    %v110 = vadd.f32 %v108, 1e-05
    %v111 = vadd.f32 %v109, 1e-05
    %v112 = vrsqrt.pop %v110
    %v113 = vrsqrt.pop %v111
    %v114 = vmul.f32 %v98, %v112
    %v115 = vmul.f32 %v99, %v113
    %v116 = vld [vmem:[%s5] sm:$0x1]
    %v118 = vlaneseq
    %v119 = vshrl.u32 %v118, 7
    %v120 = vsub.s32 0, %v119
    %v121 = vrot.slane %v116, %v120
    %v123 = vmul.f32 %v114, %v121
    %v124 = vmul.f32 %v115, %v121
    %v125 = vld [vmem:[%s6] sm:$0x1]
    %v127 = vlaneseq
    %v128 = vshrl.u32 %v127, 7
    %v129 = vsub.s32 0, %v128
    %v130 = vrot.slane %v125, %v129
    %v132 = vadd.f32 %v123, %v130
    %v133 = vadd.f32 %v124, %v130
    %v134 = vmax.f32 %v132, 0.0
    %v135 = vmax.f32 %v133, 0.0
    %v136 = vld [vmem:[%s7] sm:$0xff]
    %v137 = vld [vmem:[%s7 + $0x8] sm:$0xff]
    %v138 = vld [vmem:[%s7 + $0x10] sm:$0xff]
    %v139 = vld [vmem:[%s7 + $0x18] sm:$0xff]
    %v140 = vld [vmem:[%s7 + $0x20] sm:$0xff]
    %v141 = vld [vmem:[%s7 + $0x28] sm:$0xff]
    %v142 = vld [vmem:[%s7 + $0x30] sm:$0xff]
    %v143 = vld [vmem:[%s7 + $0x38] sm:$0xff]
    %v144 = vld [vmem:[%s8] sm:$0x1]
    %v146 = vlaneseq
    %v147 = vshrl.u32 %v146, 7
    %v148 = vsub.s32 0, %v147
    %v149 = vrot.slane %v144, %v148
    %v152 = vsel %vm88, %v134, 0
    %v155 = vsel %vm88, %v135, 0
    %157 = vmatprep.subr.mxu0 0.0
    %158 = vmatpush1.msra.mxu0 %v136
    %159 = vmatprep.subr.mxu0 0.0
    %160 = vmatpush1.msra.mxu0 %v137
    %161 = vmatprep.subr.mxu0 0.0
    %162 = vmatpush1.msra.mxu0 %v138
    %163 = vmatprep.subr.mxu0 0.0
    %164 = vmatpush1.msra.mxu0 %v139
    %165 = vmatprep.subr.mxu0 0.0
    %166 = vmatpush1.msra.mxu0 %v140
    %167 = vmatprep.subr.mxu0 0.0
    %168 = vmatpush1.msra.mxu0 %v141
    %169 = vmatprep.subr.mxu0 0.0
    %170 = vmatpush1.msra.mxu0 %v142
    %171 = vmatprep.subr.mxu0 0.0
    %172 = vmatpush1.msra.mxu0 %v143
    %173 = vmatprep.subr.mxu0 0.0
    %174 = vmatpush1.msra.mxu0 0.0
    %175 = vmatprep.subr.mxu0 0.0
    %176 = vmatpush1.msra.mxu0 0.0
    %177 = vmatprep.subr.mxu0 0.0
    %178 = vmatpush1.msra.mxu0 0.0
    %179 = vmatprep.subr.mxu0 0.0
    %180 = vmatpush1.msra.mxu0 0.0
    %181 = vmatprep.subr.mxu0 0.0
    %182 = vmatpush1.msra.mxu0 0.0
    %183 = vmatprep.subr.mxu0 0.0
    %184 = vmatpush1.msra.mxu0 0.0
    %185 = vmatprep.subr.mxu0 0.0
    %186 = vmatpush1.msra.mxu0 0.0
    %187 = vmatprep.subr.mxu0 0.0
    %188 = vmatpush1.msra.mxu0 0.0
    %189 = vmatprep.subr.mxu0 0.0
    %190 = vmatpush1.msra.mxu0 0.0
    %191 = vmatprep.subr.mxu0 0.0
    %192 = vmatpush1.msra.mxu0 0.0
    %193 = vmatprep.subr.mxu0 0.0
    %194 = vmatpush1.msra.mxu0 0.0
    %195 = vmatprep.subr.mxu0 0.0
    %196 = vmatpush1.msra.mxu0 0.0
    %197 = vmatprep.subr.mxu0 0.0
    %198 = vmatpush1.msra.mxu0 0.0
    %199 = vmatprep.subr.mxu0 0.0
    %200 = vmatpush1.msra.mxu0 0.0
    %201 = vmatprep.subr.mxu0 0.0
    %202 = vmatpush1.msra.mxu0 0.0
    %203 = vmatprep.subr.mxu0 0.0
    %204 = vmatpush1.msra.mxu0 0.0
    %205 = vmatprep.subr.mxu0 0.0
    %206 = vmatpush1.msra.mxu0 0.0
    %207 = vmatprep.subr.mxu0 0.0
    %208 = vmatpush1.msra.mxu0 0.0
    %209 = vmatprep.subr.mxu0 0.0
    %210 = vmatpush1.msra.mxu0 0.0
    %211 = vmatprep.subr.mxu0 0.0
    %212 = vmatpush1.msra.mxu0 0.0
    %213 = vmatprep.subr.mxu0 0.0
    %214 = vmatpush1.msra.mxu0 0.0
    %215 = vmatprep.subr.mxu0 0.0
    %216 = vmatpush1.msra.mxu0 0.0
    %217 = vmatprep.subr.mxu0 0.0
    %218 = vmatpush1.msra.mxu0 0.0
    %219 = vmatprep.subr.mxu0 0.0
    %220 = vmatpush1.msra.mxu0 0.0
    %221 = vmatprep.mubr.f32.mxu0 0.0
    %222 = vmatmul.mubr.f32.gmra.mrb[0].mxu0 %v152
    %v223 = vpop.f32.mrb[0].mxu0
    %v224 = vadd.f32 %v149, %v223
    %v225 = vpop.f32.mrb[0].mxu0
    %226 = vmatprep.mubr.f32.mxu0 0.0
    %227 = vmatmul.mubr.f32.gmra.mrb[0].mxu0 %v155
    %v228 = vpop.f32.mrb[0].mxu0
    %v229 = vadd.f32 %v149, %v228
    %v230 = vpop.f32.mrb[0].mxu0
    %231 = vdwg.mxu0
    %v232 = vld [vmem:[%s2] sm:$0xff]
    %v233 = vld [vmem:[%s2 + $0x8] sm:$0xff]
    %v234 = vmul.f32 %v41, %v232
    %v235 = vmul.f32 %v42, %v233
    %237 = vset.pattern.permute.xlu0 0
    %238 = vperm.xlu0 %237, %v234
    %v239 = vpop.permute.xlu0 %238
    %242 = vset.pattern.permute.xlu0 0
    %243 = vperm.xlu0 %242, %v235
    %v244 = vpop.permute.xlu0 %243
    %v246 = vmul.f32 %v224, %v239
    %v247 = vmul.f32 %v229, %v244
    %v248 = vld [vmem:[#allocation2] sm:$0x3]
    %vm249 = vcmask 261120
    %v250 = vsel %vm249, %v246, 0.0
    %v251 = vrot.slane %v250, 4
    %v252 = vadd.f32 %v250, %v251
    %v253 = vrot.slane %v252, 2
    %v254 = vadd.f32 %v252, %v253
    %v255 = vrot.slane %v254, 1
    %v256 = vadd.f32 %v254, %v255
    %v257 = vsel %vm249, %v247, 0.0
    %v258 = vrot.slane %v257, 4
    %v259 = vadd.f32 %v257, %v258
    %v260 = vrot.slane %v259, 2
    %v261 = vadd.f32 %v259, %v260
    %v262 = vrot.slane %v261, 1
    %v263 = vadd.f32 %v261, %v262
    %vm266 = vcmask 1041409
    %v267 = vsel %vm266, %v263, %v256
    %v269 = vadd.f32 %v248, %v267
    %vm270 = vcmask 254976
    %271 = vst.msk [vmem:[#allocation2] sm:$0x3] %vm270, %v269
    // Predicated region
    $region42: #{tpu_custom_call.1} parent=1 // pred_check
      %p272 = pneg %p33
    $region43: #{tpu_custom_call.1} parent=1 // pred_check_branch
      %274 = sbr.rel (%p272) target = $region45
    $region44: #{tpu_custom_call.1} parent=1 // pred_region
      %v275 = vld [vmem:[#allocation2] sm:$0x3]
      %276 = vst.msk [vmem:[#allocation3] sm:$0x3] %vm270, %v275
    $region45: #{tpu_custom_call.1} parent=1 // pred_fallthru
      _
    // Predicated region
    $region46: #{tpu_custom_call.1} parent=1 // pred_check
      _
    $region47: #{tpu_custom_call.1} parent=1 // pred_check_branch
      %278 = sbr.rel (0) target = $region49
    $region48: #{tpu_custom_call.1} parent=1 // pred_region
      %s280 = ssub.s32 32, 32
      %281 = vsyncadd [#allocation4], %s280
      %s283 = sshll.u32 [#allocation3], 4
      %s284 = int_to_ptr.vmem [resolvable:$true] %s283
      %286 = dma.vmem_to_hbm [thread:$0]  %s284, 32, %s9, [#allocation4]
    $region49: #{tpu_custom_call.1} parent=1 // pred_fallthru
      _
    // Predicated region
    $region50: #{tpu_custom_call.1} parent=1 // pred_check
      _
    $region51: #{tpu_custom_call.1} parent=1 // pred_check_branch
      %288 = sbr.rel (0) target = $region53
    $region52: #{tpu_custom_call.1} parent=1 // pred_region
      %289 = dma.done [#allocation4], 32
    $region53: #{tpu_custom_call.1} parent=1 // pred_fallthru
      _
    %290 = vsyncpa [#allocation4], 1

</llo_original>
